<compile_context>
chip_gen: v7x
topology: tpu7x:2x2x1
jax: 0.10.0
libtpu: 0.0.40
codegen_flags: <defaults>
</compile_context>

<pallas_src>
import functools

import jax
import jax.numpy as jnp
from jax.experimental import pallas as pl
from jax.experimental.pallas import tpu as pltpu


def _pos_enc_kernel(x_ref, base_ref, invp_ref, o_ref):
    """One (tile_s, d_pad) row tile:  o = x + sin(base + row0 * invP).

    base (resident VMEM) = local_row * invP + phase, so only one full-tile
    add feeds the sin; the global-row bias is a cheap (1, d_pad) row.
    """
    tile_s = x_ref.shape[0]
    row0 = (pl.program_id(0) * tile_s).astype(jnp.float32)
    bias = row0 * invp_ref[...]                       # (1, d_pad) row
    angle = base_ref[...] + bias                      # single full-tile add
    pe = jnp.sin(angle)
    o_ref[...] = (x_ref[...].astype(jnp.float32) + pe).astype(o_ref.dtype)


def _pick_tile_s(seq_len, d_model, dtype):
    """Row-tile size: ~4 MiB blocks (HBM-roofline territory on v5e/v6e),
    capped at 4096 rows, and split into >= 2 grid steps when possible so the
    parallel grid axis shards across both v7x TensorCores."""
    itemsize = jnp.dtype(dtype).itemsize
    sub = {4: 8, 2: 16, 1: 32}.get(itemsize, 8)       # sublane multiple per dtype
    target_block_bytes = 4 * 1024 * 1024
    rows = target_block_bytes // max(1, d_model * itemsize)
    rows = max(sub, min(rows, 4096, seq_len))
    if rows >= seq_len:
        if seq_len >= 2 * sub:
            # Force at least two grid steps (v7x megacore; also halves the
            # per-TC VMEM footprint).
            half = (seq_len + 1) // 2
            rows = ((half + sub - 1) // sub) * sub
        else:
            rows = seq_len                            # tiny input: one full block
    if rows != seq_len:                               # full extent is always legal
        rows = max(sub, (rows // sub) * sub)
    return rows


def _vmem_limit_bytes():
    """Half of physical VMEM (32 MiB on v7x, 64 MiB on v5e/v6e), with a safe
    fallback. Blocks are <= ~4 MiB, so this never constrains the pipeline."""
    try:
        cap = pltpu.get_tpu_info().vmem_capacity_bytes
        return int(min(64 * 1024 * 1024, max(16 * 1024 * 1024, cap // 2)))
    except Exception:
        return 32 * 1024 * 1024


@functools.partial(jax.jit, static_argnames=("tile_s",))
def positional_encoding(x, tile_s=None):
    """x: (seq_len, d_model) -> x + PE, same shape/dtype (new buffer)."""
    seq_len, d_model = x.shape
    if tile_s is None:
        tile_s = _pick_tile_s(seq_len, d_model, x.dtype)
    grid = (pl.cdiv(seq_len, tile_s),)

    # Pad the feature dim to a lane-dense multiple of 128 (sliced afterwards)
    # so output stores are unmasked.
    d_pad = ((d_model + 127) // 128) * 128

    # Hoisted per-column quantities (O(d_model) work in the wrapper):
    #   invP  = d_model * 10000**(-j)  == 1 / P
    #   phase = (j % 2) * pi/2         (cos(x) = sin(x + pi/2))
    j = jnp.arange(d_model, dtype=jnp.float32)
    inv_p = jnp.float32(d_model) * jnp.exp(-j * jnp.log(jnp.float32(10000.0)))
    phase = (jnp.arange(d_model) % 2).astype(jnp.float32) * jnp.float32(0.5 * jnp.pi)
    if d_pad != d_model:
        pad = d_pad - d_model
        inv_p = jnp.pad(inv_p, (0, pad))
        phase = jnp.pad(phase, (0, pad))
        x = jnp.pad(x, ((0, 0), (0, pad)))

    # Per-tile base angles: local_row * invP + phase, resident in VMEM.
    local = jnp.arange(tile_s, dtype=jnp.float32)[:, None]
    base = local * inv_p[None, :] + phase[None, :]    # (tile_s, d_pad) f32
    inv_p2d = inv_p[None, :]                          # (1, d_pad) f32

    out = pl.pallas_call(
        _pos_enc_kernel,
        out_shape=jax.ShapeDtypeStruct((seq_len, d_pad), x.dtype),
        grid=grid,
        in_specs=[
            pl.BlockSpec((tile_s, d_pad), lambda i: (i, 0)),   # x row tile
            pl.BlockSpec((tile_s, d_pad), lambda i: (0, 0)),   # resident base angles
            pl.BlockSpec((1, d_pad), lambda i: (0, 0)),        # resident 1/P row
        ],
        out_specs=pl.BlockSpec((tile_s, d_pad), lambda i: (i, 0)),
        compiler_params=pltpu.CompilerParams(
            dimension_semantics=("parallel",),        # v7x: shard rows over both TCs
            vmem_limit_bytes=_vmem_limit_bytes(),
        ),
    )(x, base, inv_p2d)

    if d_pad != d_model:
        out = out[:, :d_model]
    return out


def _reference(x):
    """Pure-JAX reference mirroring the PyTorch forward (float semantics)."""
    seq_len, d_model = x.shape
    pos = jnp.arange(seq_len, dtype=jnp.float32)[:, None]
    j = jnp.arange(d_model, dtype=jnp.float32)
    P = jnp.power(jnp.float32(10000.0), j) / jnp.float32(d_model)
    pe = pos / P
    even = (jnp.arange(d_model) % 2) == 0
    pe = jnp.where(even[None, :], jnp.sin(pe), jnp.cos(pe))
    return (x.astype(jnp.float32) + pe).astype(x.dtype)


if __name__ == "__main__":
    k0, k1 = jax.random.split(jax.random.PRNGKey(0))

    # Lane-dense primary case: d_model = 128 keeps stores unmasked.
    seq_len, d_model = 64, 128
    x = jax.random.normal(k0, (seq_len, d_model), dtype=jnp.float32)
    ref = _reference(x)

    # Forced small tile -> 4-step grid exercises the tiled path.
    out = jax.block_until_ready(positional_encoding(x, tile_s=16))
    assert out.shape == (seq_len, d_model)
    assert out.dtype == jnp.float32
    # sin of moderately large arguments goes through different transcendental
    # lowerings (XLA reference vs Mosaic), so tolerance is slightly loose.
    assert jnp.allclose(out, ref, atol=2e-3, rtol=2e-3), float(
        jnp.max(jnp.abs(out - ref))
    )

    # Auto-tiled path: tile picker splits into >= 2 grid steps (megacore).
    out2 = jax.block_until_ready(positional_encoding(x))
    assert jnp.allclose(out2, ref, atol=2e-3, rtol=2e-3)

    # Ragged feature dim exercises the lane-padding (d_model -> 128) path.
    x3 = jax.random.normal(k1, (40, 96), dtype=jnp.float32)
    out3 = jax.block_until_ready(positional_encoding(x3))
    assert out3.shape == (40, 96)
    assert jnp.allclose(out3, _reference(x3), atol=2e-3, rtol=2e-3)

    print("KERNEL_OK")
</pallas_src>

<mosaic_0001>
module attributes {stable_mosaic.version = 11 : i64} {
  func.func @_pos_enc_kernel(%arg0: i32, %arg1: memref<16x128xf32, #tpu.memory_space<vmem>>, %arg2: memref<16x128xf32, #tpu.memory_space<vmem>>, %arg3: memref<1x128xf32, #tpu.memory_space<vmem>>, %arg4: memref<16x128xf32, #tpu.memory_space<vmem>>) attributes {dimension_semantics = [#tpu.dimension_semantics<parallel>], iteration_bounds = array<i64: 4>, scalar_prefetch = 0 : i64, scratch_operands = 0 : i64, tpu.core_type = #tpu.core_type<tc>, window_params = [{transform_indices = @transform_0, window_bounds = array<i64: 16, 128>}, {pipeline_mode = #tpu.pipeline_mode<synchronous>, transform_indices = @transform_1, window_bounds = array<i64: 16, 128>}, {pipeline_mode = #tpu.pipeline_mode<synchronous>, transform_indices = @transform_2, window_bounds = array<i64: 1, 128>}, {transform_indices = @transform_3, window_bounds = array<i64: 16, 128>}]} {
    %c16_i32 = arith.constant 16 : i32
    %0 = arith.muli %arg0, %c16_i32 : i32
    %1 = arith.sitofp %0 : i32 to f32
    %c0 = arith.constant 0 : index
    %c0_0 = arith.constant 0 : index
    %2 = vector.load %arg3[%c0, %c0_0] : memref<1x128xf32, #tpu.memory_space<vmem>>, vector<1x128xf32>
    %3 = vector.broadcast %1 : f32 to vector<1x128xf32>
    %4 = arith.mulf %3, %2 : vector<1x128xf32>
    %c0_1 = arith.constant 0 : index
    %c0_2 = arith.constant 0 : index
    %5 = vector.load %arg2[%c0_1, %c0_2] : memref<16x128xf32, #tpu.memory_space<vmem>>, vector<16x128xf32>
    %6 = vector.broadcast %4 : vector<1x128xf32> to vector<16x128xf32>
    %7 = arith.addf %5, %6 : vector<16x128xf32>
    %8 = math.sin %7 : vector<16x128xf32>
    %c0_3 = arith.constant 0 : index
    %c0_4 = arith.constant 0 : index
    %9 = vector.load %arg1[%c0_3, %c0_4] : memref<16x128xf32, #tpu.memory_space<vmem>>, vector<16x128xf32>
    %10 = arith.addf %9, %8 : vector<16x128xf32>
    %c0_5 = arith.constant 0 : index
    %c0_6 = arith.constant 0 : index
    %11 = vector.load %arg4[%c0_5, %c0_6] : memref<16x128xf32, #tpu.memory_space<vmem>>, vector<16x128xf32>
    tpu.vector_store %arg4[%c0_5, %c0_6], %10 {strides = array<i32>} : memref<16x128xf32, #tpu.memory_space<vmem>>, vector<16x128xf32>,
    return
  }
  func.func @transform_0(%arg0: i32) -> (i32, i32) {
    %c0_i32 = arith.constant 0 : i32
    %c0_i32_0 = arith.constant 0 : i32
    return %arg0, %c0_i32 : i32, i32
  }
  func.func @transform_1(%arg0: i32) -> (i32, i32) {
    %c0_i32 = arith.constant 0 : i32
    %c0_i32_0 = arith.constant 0 : i32
    %c0_i32_1 = arith.constant 0 : i32
    return %c0_i32, %c0_i32_0 : i32, i32
  }
  func.func @transform_2(%arg0: i32) -> (i32, i32) {
    %c0_i32 = arith.constant 0 : i32
    %c0_i32_0 = arith.constant 0 : i32
    %c0_i32_1 = arith.constant 0 : i32
    return %c0_i32, %c0_i32_0 : i32, i32
  }
  func.func @transform_3(%arg0: i32) -> (i32, i32) {
    %c0_i32 = arith.constant 0 : i32
    %c0_i32_0 = arith.constant 0 : i32
    return %arg0, %c0_i32 : i32, i32
  }
}

</mosaic_0001>

<llo_original>
// kernel: positional_encoding.1
$region0: #{positional_encoding.1}
  #allocation0 [shape = 'u32[]', space=smem, size = 0x4, offset = 0x4, fixed_abs, tag = 'smem constant byte address 0x4 - core index']
  #allocation1 [shape = 'u32[144,128]{1,0:T(1,128)}', space=vmem, size = 0x12000, scoped, tag = 'internal scratch']
  %s0 = inlined_call_operand.hbm [shape: f32[64,128], index: 0, kind: input, shape index: {}]
  %s1 = inlined_call_operand.vmem [shape: f32[16,128], index: 1, kind: input, shape index: {}]
  %s2 = inlined_call_operand.vmem [shape: f32[1,128], index: 2, kind: input, shape index: {}]
  %s3 = inlined_call_operand.hbm [shape: f32[64,128], index: 3, kind: output, shape index: {}]
  %s4 = sld [smem:[#allocation0]]
  $region49: #{positional_encoding.1} parent=0
    _
  %s6 = ssub.s32 1, %s4
  %s7 = scalar_select 0, %s6, %s4
  $region1: #{positional_encoding.1} parent=0
    #allocation2 [shape = 'u8[16384]{0}', space=vmem, size = 0x4000, scoped, tag = 'input window, operand 0']
    #allocation3 [shape = 's32[2]{0}', space=sflag, size = 0x8, scoped, tag = 'scoped memory for positional_encoding.1']
    #allocation4 [shape = 's32[2]{0}', space=sflag, size = 0x8, scoped, tag = 'scoped memory for positional_encoding.1']
    #allocation5 [shape = 'u8[16384]{0}', space=vmem, size = 0x4000, scoped, tag = 'output window, operand 0']
    %8 = vsyncpa [#allocation3], 0
    %s9 = scalar_lea.sflag [#allocation3], 1
    %10 = vsyncpa %s9, 0
    %11 = vsyncpa [#allocation4], 0
    %s12 = scalar_lea.sflag [#allocation4], 1
    %13 = vsyncpa %s12, 0
    loop: start=0, step=1, limit=6
    $region2: #{positional_encoding.1} parent=1 // loop_pre_header
      _
    $region3: #{positional_encoding.1} parent=1 // loop_header
      %s15 = sphi 0, %s19
      %p16 = scmp.ge.s32.totalorder %s15, 6
      %s25 = sphi 0, %s27
      %s28 = sphi 0, %s25
      %s29 = sphi 0, %s28
      %s45 = sphi 0, %s29
      %s49 = sphi 0, %s49
      %s51 = sphi 0, %s49
      %s52 = sphi 0, %s51
      %s66 = sphi 0, %s52
      %s70 = sphi 0, %s70
      %s72 = sphi 0, %s70
      %s73 = sphi 0, %s72
      %s87 = sphi 0, %s73
      %s93 = sphi 0, %s95
      %s96 = sphi 0, %s93
      %s97 = sphi 0, %s96
      %s113 = sphi 0, %s97
    $region4: #{positional_encoding.1} parent=1 // loop_header_branch
      %18 = sbr.rel (%p16) target = $region8
    $region5: #{positional_encoding.1} parent=1 // loop_body
      %s20 = ssub.s32 %s15, 1
      %s21 = ssub.s32 %s15, 2
      %s22 = sadd.s32 %s15, 1
      %s23 = ssub.s32 %s15, %s22
      %p24 = scmp.eq.s32.totalorder %s23, 0
      %s26 = sadd.s32 %s25, 1
      %s27 = scalar_select %p24, %s25, %s26
      %p30 = pneg %p24
      %p31 = scmp.eq.s32.totalorder %s15, 3
      %p32 = por %p30, %p31
      %p33 = scmp.ne.s32.totalorder %s25, %s28
      %p34 = scmp.eq.s32.totalorder %s15, 0
      %p35 = por %p33, %p34
      %p36 = scmp.ne.s32.totalorder %s25, %s28
      %p37 = scmp.eq.s32.totalorder %s20, 3
      %p38 = por %p36, %p37
      %p39 = scmp.ne.s32.totalorder %s28, %s29
      %p40 = scmp.eq.s32.totalorder %s20, 0
      %p41 = por %p39, %p40
      %p42 = scmp.ne.s32.totalorder %s28, %s29
      %p43 = scmp.eq.s32.totalorder %s21, 3
      %p44 = por %p42, %p43
      %p46 = scmp.ne.s32.totalorder %s29, %s45
      %p47 = scmp.eq.s32.totalorder %s21, 0
      %p48 = por %p46, %p47
      %s50 = sadd.s32 %s49, 1
      %p53 = scmp.eq.s32.totalorder %s15, 3
      %p54 = scmp.ne.s32.totalorder %s49, %s51
      %p55 = scmp.eq.s32.totalorder %s15, 0
      %p56 = por %p54, %p55
      %p57 = scmp.ne.s32.totalorder %s49, %s51
      %p58 = scmp.eq.s32.totalorder %s20, 3
      %p59 = por %p57, %p58
      %p60 = scmp.ne.s32.totalorder %s51, %s52
      %p61 = scmp.eq.s32.totalorder %s20, 0
      %p62 = por %p60, %p61
      %p63 = scmp.ne.s32.totalorder %s51, %s52
      %p64 = scmp.eq.s32.totalorder %s21, 3
      %p65 = por %p63, %p64
      %p67 = scmp.ne.s32.totalorder %s52, %s66
      %p68 = scmp.eq.s32.totalorder %s21, 0
      %p69 = por %p67, %p68
      %s71 = sadd.s32 %s70, 1
      %p74 = scmp.eq.s32.totalorder %s15, 3
      %p75 = scmp.ne.s32.totalorder %s70, %s72
      %p76 = scmp.eq.s32.totalorder %s15, 0
      %p77 = por %p75, %p76
      %p78 = scmp.ne.s32.totalorder %s70, %s72
      %p79 = scmp.eq.s32.totalorder %s20, 3
      %p80 = por %p78, %p79
      %p81 = scmp.ne.s32.totalorder %s72, %s73
      %p82 = scmp.eq.s32.totalorder %s20, 0
      %p83 = por %p81, %p82
      %p84 = scmp.ne.s32.totalorder %s72, %s73
      %p85 = scmp.eq.s32.totalorder %s21, 3
      %p86 = por %p84, %p85
      %p88 = scmp.ne.s32.totalorder %s73, %s87
      %p89 = scmp.eq.s32.totalorder %s21, 0
      %p90 = por %p88, %p89
      %s91 = ssub.s32 %s15, %s22
      %p92 = scmp.eq.s32.totalorder %s91, 0
      %s94 = sadd.s32 %s93, 1
      %s95 = scalar_select %p92, %s93, %s94
      %p98 = pneg %p92
      %p99 = scmp.eq.s32.totalorder %s15, 3
      %p100 = por %p98, %p99
      %p101 = scmp.ne.s32.totalorder %s93, %s96
      %p102 = scmp.eq.s32.totalorder %s15, 0
      %p103 = por %p101, %p102
      %p104 = scmp.ne.s32.totalorder %s93, %s96
      %p105 = scmp.eq.s32.totalorder %s20, 3
      %p106 = por %p104, %p105
      %p107 = scmp.ne.s32.totalorder %s96, %s97
      %p108 = scmp.eq.s32.totalorder %s20, 0
      %p109 = por %p107, %p108
      %p110 = scmp.ne.s32.totalorder %s96, %s97
      %p111 = scmp.eq.s32.totalorder %s21, 3
      %p112 = por %p110, %p111
      %p114 = scmp.ne.s32.totalorder %s97, %s113
      %p115 = scmp.eq.s32.totalorder %s21, 0
      %p116 = por %p114, %p115
      %p117 = scmp.le.s32.totalorder 1, %s15
      %p118 = scmp.lt.s32.totalorder %s15, 5
      %p119 = pnand %p117, %p118
      %p120 = pneg %p119
      // Predicated region
      $region9: #{positional_encoding.1} parent=5 // pred_check
        _
      $region10: #{positional_encoding.1} parent=5 // pred_check_branch
        %122 = sbr.rel (%p119) target = $region12
      $region11: #{positional_encoding.1} parent=5 // pred_region
        %s123 = ssub.s32 %s15, 1
        // Predicated region
        $region13: #{positional_encoding.1} parent=11 // pred_check
          %p124 = pneg %p62
        $region14: #{positional_encoding.1} parent=11 // pred_check_branch
          %126 = sbr.rel (%p124) target = $region16
        $region15: #{positional_encoding.1} parent=11 // pred_region
          _
        $region16: #{positional_encoding.1} parent=11 // pred_fallthru
          _
        // Predicated region
        $region17: #{positional_encoding.1} parent=11 // pred_check
          %p127 = pneg %p83
        $region18: #{positional_encoding.1} parent=11 // pred_check_branch
          %129 = sbr.rel (%p127) target = $region20
        $region19: #{positional_encoding.1} parent=11 // pred_region
          _
        $region20: #{positional_encoding.1} parent=11 // pred_fallthru
          _
      $region12: #{positional_encoding.1} parent=5 // pred_fallthru
        _
      %p130 = scmp.lt.s32.totalorder %s15, 4
      // Predicated region
      $region21: #{positional_encoding.1} parent=5 // pred_check
        %p131 = pneg %p130
      $region22: #{positional_encoding.1} parent=5 // pred_check_branch
        %133 = sbr.rel (%p131) target = $region24
      $region23: #{positional_encoding.1} parent=5 // pred_region
        // Predicated region
        $region25: #{positional_encoding.1} parent=23 // pred_check
          %p134 = pneg %p35
        $region26: #{positional_encoding.1} parent=23 // pred_check_branch
          %136 = sbr.rel (%p134) target = $region28
        $region27: #{positional_encoding.1} parent=23 // pred_region
          %s137 = sand.u32 %s25, 1
          %s138 = scalar_lea.sflag [#allocation3], %s137
          %s139 = sand.u32 %s25, 1
          %s140 = smul.addr %s139, 16
          %s141 = scalar_lea.vmem [#allocation2], %s140
          %s142 = smul.u32 2, %s15
          %s144 = ssub.s32 256, 256
          %145 = vsyncadd %s138, %s144
          %s146 = smul.addr %s142, 128
          %s147 = scalar_lea.hbm %s0, %s146
          %s148 = sshll.u32 %s141, 4
          %s149 = int_to_ptr.vmem [resolvable:$true] %s148
          %154 = dma.hbm_to_vmem [thread:$0]  %s147, 256, %s149, %s138, 128, 128, 8
        $region28: #{positional_encoding.1} parent=23 // pred_fallthru
          _
      $region24: #{positional_encoding.1} parent=5 // pred_fallthru
        _
      %p155 = scmp.le.s32.totalorder 1, %s15
      %p156 = scmp.lt.s32.totalorder %s15, 5
      %p157 = pnand %p155, %p156
      %p158 = pneg %p157
      // Predicated region
      $region29: #{positional_encoding.1} parent=5 // pred_check
        _
      $region30: #{positional_encoding.1} parent=5 // pred_check_branch
        %160 = sbr.rel (%p157) target = $region32
      $region31: #{positional_encoding.1} parent=5 // pred_region
        %s161 = ssub.s32 %s15, 1
        %s162 = sand.u32 %s28, 1
        %s163 = scalar_lea.sflag [#allocation3], %s162
        %s164 = sand.u32 %s28, 1
        %s165 = smul.addr %s164, 16
        %s166 = scalar_lea.vmem [#allocation2], %s165
        // Predicated region
        $region33: #{positional_encoding.1} parent=31 // pred_check
          %p167 = pneg %p41
        $region34: #{positional_encoding.1} parent=31 // pred_check_branch
          %169 = sbr.rel (%p167) target = $region36
        $region35: #{positional_encoding.1} parent=31 // pred_region
          %170 = dma.done %s163, 256
        $region36: #{positional_encoding.1} parent=31 // pred_fallthru
          _
        %s171 = sand.u32 %s28, 1
        %s172 = scalar_lea.sflag [#allocation3], %s171
        %s173 = sand.u32 %s28, 1
        %s174 = smul.addr %s173, 16
        %s175 = scalar_lea.vmem [#allocation2], %s174
        %p176 = pneg %p41
        %p177 = pneg %p38
        %p178 = pneg %p62
        %p179 = pneg %p59
        %p180 = pneg %p83
        %p181 = pneg %p80
        %p182 = pneg %p109
        %p183 = pneg %p106
        %s184 = sand.u32 %s96, 1
        %s185 = scalar_lea.sflag [#allocation4], %s184
        %s186 = sand.u32 %s96, 1
        %s187 = smul.addr %s186, 16
        %s188 = scalar_lea.vmem [#allocation5], %s187
        %s189 = smul.u32 2, %s20
        %s190 = smul.u32 2, %s20
        %s191 = smul.u32 %s20, 16
        %s192 = scvt.s32.f32 %s191
        %v193 = vld [vmem:[%s2] sm:$0x1]
        %v194 = vstv %s192
        %v195 = vmul.f32 %v194, %v193
        %v196 = vld [vmem:[%s1] sm:$0xff]
        %v197 = vld [vmem:[%s1 + $0x8] sm:$0xff]
        %v199 = vlaneseq
        %v200 = vshrl.u32 %v199, 7
        %v201 = vsub.s32 0, %v200
        %v202 = vrot.slane %v195, %v201
        %v204 = vadd.f32 %v196, %v202
        %v205 = vadd.f32 %v197, %v202
        %v206 = vand.u32 2147483647, %v204
        %vm207 = vcmp.le.f32.partialorder %v206, 0.7853982
        %vm208 = vcmp.lt.s32.totalorder %v204, 0
        %v209 = vand.u32 %v204, 2139095040
        %v210 = vshrl.u32 %v209, 23
        %v211 = vsub.s32 %v210, 127
        %v212 = vand.u32 2147483647, %v204
        %v213 = vand.u32 %v212, 8388607
        %v214 = vor.u32 %v213, 8388608
        %v215 = vsub.s32 0, %v214
        %v216 = vadd.s32 %v211, 1
        %vm217 = vcmp.gt.s32.totalorder %v216, 0
        %v218 = vsel %vm217, %v216, 0
        %v219 = vshrl.u32 %v218, 5
        %v220 = vand.u32 %v218, 31
        %v221 = vsub.s32 32, %v220
        %v222 = vshrl.u32 683565275, %v221
        %v223 = vshll.u32 683565275, %v220
        %v224 = vshrl.u32 2475754826, %v221
        %v225 = vor.u32 %v223, %v224
        %v226 = vshll.u32 2475754826, %v220
        %v227 = vshrl.u32 2131351028, %v221
        %v228 = vor.u32 %v226, %v227
        %v229 = vshll.u32 2131351028, %v220
        %v230 = vshrl.u32 2102212464, %v221
        %v231 = vor.u32 %v229, %v230
        %v232 = vshll.u32 2102212464, %v220
        %v233 = vshrl.u32 920167782, %v221
        %v234 = vor.u32 %v232, %v233
        %v235 = vshll.u32 920167782, %v220
        %v236 = vshrl.u32 1326507024, %v221
        %v237 = vor.u32 %v235, %v236
        %vm238 = vcmp.lt.s32.totalorder %v219, 1
        %vm239 = vcmp.lt.s32.totalorder %v219, 2
        %vm240 = vcmp.lt.s32.totalorder %v219, 3
        %vm241 = vcmp.lt.s32.totalorder %v219, 4
        %v242 = vsel %vm238, %v222, %v225
        %v243 = vsel %vm241, %v231, 2102212464
        %v244 = vsel %vm240, %v228, %v243
        %v245 = vsel %vm239, %v242, %v244
        %v246 = vsel %vm238, %v225, %v228
        %v247 = vsel %vm241, %v234, 920167782
        %v248 = vsel %vm240, %v231, %v247
        %v249 = vsel %vm239, %v246, %v248
        %v250 = vsel %vm238, %v228, %v231
        %v251 = vsel %vm241, %v237, 1326507024
        %v252 = vsel %vm240, %v234, %v251
        %v253 = vsel %vm239, %v250, %v252
        %v254 = vshll.u32 %v214, 8
        %v255 = vmul.u32.u64.compose %v254, %v253
        %v256 = vextract.low.u32 %v255
        %v257 = vextract.high.u32 %v255
        %v258 = vmul.u32.u64.compose %v254, %v249
        %v259 = vextract.low.u32 %v258
        %v260 = vextract.high.u32 %v258
        %v261 = vmul.u32 %v254, %v245
        %v262 = vadd.s32 %v257, %v259
        %vm263 = vc.u32 %v257, %v259
        %v264 = vadd.s32 %v260, 1
        %v265 = vsel %vm263, %v264, %v260
        %v266 = vadd.s32 %v261, %v265
        %v267 = vadd.s32 %v266, 536870912
        %v268 = vshrl.u32 %v267, 30
        %v269 = vshll.u32 %v268, 30
        %v270 = vsub.s32 %v266, %v269
        %vm271 = vcmp.lt.s32.totalorder %v270, 0
        %v272 = vsub.s32 0, %v270
        %v273 = vsel %vm271, %v272, %v270
        %v274 = vclz %v273
        %v275 = vsub.s32 %v274, 2
        %vm276 = vcmp.gt.s32.totalorder 0, %v275
        %v277 = vsel %vm276, 0, %v275
        %v278 = vsub.s32 32, %v277
        %v279 = vshll.u32 %v270, %v277
        %v280 = vshrl.u32 %v262, %v278
        %v281 = vor.u32 %v279, %v280
        %v282 = vsub.s32 4294967266, %v277
        %v283 = vadd.s32 %v282, 127
        %v284 = vshll.u32 %v283, 23
        %v285 = vor.u32 4788187, %v284
        %v286 = vand.u32 2147483647, %v285
        %v288 = vcvt.s32.f32 %v281
        %v289 = vmul.f32 %v288, %v286
        %v290 = vxor.u32 %v289, 2147483648
        %v291 = vsel %vm208, %v290, %v289
        %v292 = vsub.s32 4, %v268
        %v293 = vsel %vm208, %v292, %v268
        %v294 = vsel %vm207, %v204, %v291
        %v295 = vsel %vm207, 0, %v293
        %v296 = vcosq.f32.pop %v294
        %v297 = vsinq.f32.pop %v294
        %vm298 = vweird.f32 %v204
        %v299 = vadd.s32 %v295, 3
        %v300 = vand.u32 %v299, 3
        %vm301 = vcmp.lt.s32.totalorder %v300, 2
        %vm302 = vcmp.eq.s32.totalorder %v300, 0
        %v303 = vxor.u32 %v297, 2147483648
        %v304 = vsel %vm302, %v296, %v303
        %vm305 = vcmp.eq.s32.totalorder %v300, 2
        %v306 = vxor.u32 %v296, 2147483648
        %v307 = vsel %vm305, %v306, %v297
        %v308 = vsel %vm301, %v304, %v307
        %v309 = vsel %vm298, nan, %v308
        %v310 = vand.u32 2147483647, %v205
        %vm311 = vcmp.le.f32.partialorder %v310, 0.7853982
        %vm312 = vcmp.lt.s32.totalorder %v205, 0
        %v313 = vand.u32 %v205, 2139095040
        %v314 = vshrl.u32 %v313, 23
        %v315 = vsub.s32 %v314, 127
        %v316 = vand.u32 2147483647, %v205
        %v317 = vand.u32 %v316, 8388607
        %v318 = vor.u32 %v317, 8388608
        %v319 = vsub.s32 0, %v318
        %v320 = vadd.s32 %v315, 1
        %vm321 = vcmp.gt.s32.totalorder %v320, 0
        %v322 = vsel %vm321, %v320, 0
        %v323 = vshrl.u32 %v322, 5
        %v324 = vand.u32 %v322, 31
        %v325 = vsub.s32 32, %v324
        %v326 = vshrl.u32 683565275, %v325
        %v327 = vshll.u32 683565275, %v324
        %v328 = vshrl.u32 2475754826, %v325
        %v329 = vor.u32 %v327, %v328
        %v330 = vshll.u32 2475754826, %v324
        %v331 = vshrl.u32 2131351028, %v325
        %v332 = vor.u32 %v330, %v331
        %v333 = vshll.u32 2131351028, %v324
        %v334 = vshrl.u32 2102212464, %v325
        %v335 = vor.u32 %v333, %v334
        %v336 = vshll.u32 2102212464, %v324
        %v337 = vshrl.u32 920167782, %v325
        %v338 = vor.u32 %v336, %v337
        %v339 = vshll.u32 920167782, %v324
        %v340 = vshrl.u32 1326507024, %v325
        %v341 = vor.u32 %v339, %v340
        %vm342 = vcmp.lt.s32.totalorder %v323, 1
        %vm343 = vcmp.lt.s32.totalorder %v323, 2
        %vm344 = vcmp.lt.s32.totalorder %v323, 3
        %vm345 = vcmp.lt.s32.totalorder %v323, 4
        %v346 = vsel %vm342, %v326, %v329
        %v347 = vsel %vm345, %v335, 2102212464
        %v348 = vsel %vm344, %v332, %v347
        %v349 = vsel %vm343, %v346, %v348
        %v350 = vsel %vm342, %v329, %v332
        %v351 = vsel %vm345, %v338, 920167782
        %v352 = vsel %vm344, %v335, %v351
        %v353 = vsel %vm343, %v350, %v352
        %v354 = vsel %vm342, %v332, %v335
        %v355 = vsel %vm345, %v341, 1326507024
        %v356 = vsel %vm344, %v338, %v355
        %v357 = vsel %vm343, %v354, %v356
        %v358 = vshll.u32 %v318, 8
        %v359 = vmul.u32.u64.compose %v358, %v357
        %v360 = vextract.low.u32 %v359
        %v361 = vextract.high.u32 %v359
        %v362 = vmul.u32.u64.compose %v358, %v353
        %v363 = vextract.low.u32 %v362
        %v364 = vextract.high.u32 %v362
        %v365 = vmul.u32 %v358, %v349
        %v366 = vadd.s32 %v361, %v363
        %vm367 = vc.u32 %v361, %v363
        %v368 = vadd.s32 %v364, 1
        %v369 = vsel %vm367, %v368, %v364
        %v370 = vadd.s32 %v365, %v369
        %v371 = vadd.s32 %v370, 536870912
        %v372 = vshrl.u32 %v371, 30
        %v373 = vshll.u32 %v372, 30
        %v374 = vsub.s32 %v370, %v373
        %vm375 = vcmp.lt.s32.totalorder %v374, 0
        %v376 = vsub.s32 0, %v374
        %v377 = vsel %vm375, %v376, %v374
        %v378 = vclz %v377
        %v379 = vsub.s32 %v378, 2
        %vm380 = vcmp.gt.s32.totalorder 0, %v379
        %v381 = vsel %vm380, 0, %v379
        %v382 = vsub.s32 32, %v381
        %v383 = vshll.u32 %v374, %v381
        %v384 = vshrl.u32 %v366, %v382
        %v385 = vor.u32 %v383, %v384
        %v386 = vsub.s32 4294967266, %v381
        %v387 = vadd.s32 %v386, 127
        %v388 = vshll.u32 %v387, 23
        %v389 = vor.u32 4788187, %v388
        %v390 = vand.u32 2147483647, %v389
        %v392 = vcvt.s32.f32 %v385
        %v393 = vmul.f32 %v392, %v390
        %v394 = vxor.u32 %v393, 2147483648
        %v395 = vsel %vm312, %v394, %v393
        %v396 = vsub.s32 4, %v372
        %v397 = vsel %vm312, %v396, %v372
        %v398 = vsel %vm311, %v205, %v395
        %v399 = vsel %vm311, 0, %v397
        %v400 = vcosq.f32.pop %v398
        %v401 = vsinq.f32.pop %v398
        %vm402 = vweird.f32 %v205
        %v403 = vadd.s32 %v399, 3
        %v404 = vand.u32 %v403, 3
        %vm405 = vcmp.lt.s32.totalorder %v404, 2
        %vm406 = vcmp.eq.s32.totalorder %v404, 0
        %v407 = vxor.u32 %v401, 2147483648
        %v408 = vsel %vm406, %v400, %v407
        %vm409 = vcmp.eq.s32.totalorder %v404, 2
        %v410 = vxor.u32 %v400, 2147483648
        %v411 = vsel %vm409, %v410, %v401
        %v412 = vsel %vm405, %v408, %v411
        %v413 = vsel %vm402, nan, %v412
        %v414 = vld [vmem:[%s166] sm:$0xff]
        %v415 = vld [vmem:[%s166 + $0x8] sm:$0xff]
        %v416 = vadd.f32 %v414, %v309
        %v417 = vadd.f32 %v415, %v413
        %418 = vst [vmem:[%s188] sm:$0xff] %v416
        %419 = vst [vmem:[%s188 + $0x8] sm:$0xff] %v417
        %s420 = sand.u32 %s96, 1
        %s421 = scalar_lea.sflag [#allocation4], %s420
        %s422 = sand.u32 %s96, 1
        %s423 = smul.addr %s422, 16
        %s424 = scalar_lea.vmem [#allocation5], %s423
        // Predicated region
        $region37: #{positional_encoding.1} parent=31 // pred_check
          %p425 = pneg %p106
        $region38: #{positional_encoding.1} parent=31 // pred_check_branch
          %427 = sbr.rel (%p425) target = $region40
        $region39: #{positional_encoding.1} parent=31 // pred_region
          %s428 = smul.u32 2, %s20
          %s430 = ssub.s32 256, 256
          %431 = vsyncadd %s421, %s430
          %s432 = smul.addr %s428, 128
          %s433 = scalar_lea.hbm %s3, %s432
          %s434 = sshll.u32 %s424, 4
          %s435 = int_to_ptr.vmem [resolvable:$true] %s434
          %440 = dma.vmem_to_hbm [thread:$0]  %s435, 256, %s433, %s421, 128, 128, 8
        $region40: #{positional_encoding.1} parent=31 // pred_fallthru
          _
      $region32: #{positional_encoding.1} parent=5 // pred_fallthru
        _
      %p441 = scmp.le.s32.totalorder 2, %s15
      // Predicated region
      $region41: #{positional_encoding.1} parent=5 // pred_check
        %p442 = pneg %p441
      $region42: #{positional_encoding.1} parent=5 // pred_check_branch
        %444 = sbr.rel (%p442) target = $region44
      $region43: #{positional_encoding.1} parent=5 // pred_region
        %s445 = ssub.s32 %s15, 2
        // Predicated region
        $region45: #{positional_encoding.1} parent=43 // pred_check
          %p446 = pneg %p112
        $region46: #{positional_encoding.1} parent=43 // pred_check_branch
          %448 = sbr.rel (%p446) target = $region48
        $region47: #{positional_encoding.1} parent=43 // pred_region
          %s449 = sand.u32 %s97, 1
          %s450 = scalar_lea.sflag [#allocation4], %s449
          %s451 = sand.u32 %s97, 1
          %s452 = smul.addr %s451, 16
          %s453 = scalar_lea.vmem [#allocation5], %s452
          %454 = dma.done %s450, 256
        $region48: #{positional_encoding.1} parent=43 // pred_fallthru
          _
      $region44: #{positional_encoding.1} parent=5 // pred_fallthru
        _
    $region6: #{positional_encoding.1} parent=1 // loop_footer
      %s19 = sadd.s32 1, %s15
    $region7: #{positional_encoding.1} parent=1 // loop_footer_branch
      %14 = sbr.rel target = $region3
    $region8: #{positional_encoding.1} parent=1 // loop_exit
      _
    %455 = vsyncpa [#allocation3], 1
    %s456 = scalar_lea.sflag [#allocation3], 1
    %457 = vsyncpa %s456, 1
    %458 = vsyncpa [#allocation4], 1
    %s459 = scalar_lea.sflag [#allocation4], 1
    %460 = vsyncpa %s459, 1

</llo_original>
